<compile_context>
chip_gen: v5e
topology: v5e:2x2
jax: 0.10.0
libtpu: 0.0.40
codegen_flags: <defaults>
</compile_context>

<pallas_src>
import functools

import jax
import jax.numpy as jnp
import numpy as np
from jax.experimental import pallas as pl
from jax.experimental.pallas import tpu as pltpu

_BN_EPS = 1e-5
# Set to jnp.bfloat16 on v6e/v7x for ~2x MXU throughput (accumulation stays
# f32 via preferred_element_type). Kept at f32 to match PyTorch fp32 numerics.
_MATMUL_INPUT_DTYPE = jnp.float32


def _shift_lanes(x, off):
    """out[:, p] = x[:, p + off] (cyclic; wrapped positions are masked by caller)."""
    if off == 0:
        return x
    return jnp.concatenate([x[:, off:], x[:, :off]], axis=1)


def _fused_conv_block_kernel(x_ref, m_ref, w1_ref, b1_ref, g1_ref, be1_ref,
                             w2_ref, b2_ref, g2_ref, be2_ref, out_ref, *, width):
    """Fused (Conv3x3 + bias -> BatchNorm(train) -> ReLU) x 2.

    x_ref  : (Cin,  NHW)    flattened input, pixels on lanes
    m_ref  : (9,    NHW)    0/1 per-tap validity masks (encode the zero pad)
    w*_ref : (Cout, 9*Cin)  conv taps, column order (ky, kx, cin)
    b*/g*/be*_ref : (Cout, 1)  conv bias / BN gamma / BN beta
    out_ref: (Cout, NHW)    lane-dense output
    """
    masks = m_ref[...]  # loaded once, reused by both stages (same geometry)

    def conv3x3_bn_relu(x, w_ref, b_ref, g_ref, be_ref):
        # Transposed im2col so the GEMM output is lane-dense:
        # P = (9*C, NHW) built from 9 lane-shifted + masked copies of x,
        # then a single MXU matmul (Cout, 9*C) @ (9*C, NHW).
        taps = []
        for ky in range(3):
            for kx in range(3):
                off = (ky - 1) * width + (kx - 1)  # flat-index shift of this tap
                tap = ky * 3 + kx
                shifted = _shift_lanes(x, off)
                taps.append(shifted * masks[tap:tap + 1, :])
        patches = jnp.concatenate(taps, axis=0)               # (9*C, NHW)
        acc = jnp.dot(w_ref[...].astype(_MATMUL_INPUT_DTYPE),
                      patches.astype(_MATMUL_INPUT_DTYPE),
                      preferred_element_type=jnp.float32)     # (Cout, NHW)
        acc = acc + b_ref[...]                                # conv bias
        # BatchNorm2d training forward: global stats over (N,H,W) == lane axis,
        # biased variance, eps = 1e-5, fused with affine + ReLU in one epilogue.
        mean = jnp.mean(acc, axis=1, keepdims=True)
        var = jnp.mean((acc - mean) ** 2, axis=1, keepdims=True)
        y = (acc - mean) * jax.lax.rsqrt(var + _BN_EPS) * g_ref[...] + be_ref[...]
        return jnp.maximum(y, 0.0)                            # ReLU

    y1 = conv3x3_bn_relu(x_ref[...], w1_ref, b1_ref, g1_ref, be1_ref)
    # Stage-1 activation feeds stage 2 directly — no HBM intermediate.
    y2 = conv3x3_bn_relu(y1, w2_ref, b2_ref, g2_ref, be2_ref)
    out_ref[...] = y2.astype(out_ref.dtype)
    # TODO(synk): nn.BatchNorm2d also updates running_mean/running_var buffers
    # in training mode; that side effect does not affect the forward output.


def _make_tap_masks(N, H, W):
    """(9, N*H*W) float32 masks: 1 where tap (ky,kx) reads a real pixel, 0 on pad."""
    p = np.arange(N * H * W)
    h = (p // W) % H
    w = p % W
    masks = []
    for ky in range(3):
        for kx in range(3):
            dy, dx = ky - 1, kx - 1
            m = (h + dy >= 0) & (h + dy < H) & (w + dx >= 0) & (w + dx < W)
            masks.append(m)
    return jnp.asarray(np.stack(masks).astype(np.float32))


def _to_kernel_layout(w, b, g, be):
    """PyTorch shapes -> kernel shapes: (Cout,Cin,3,3)->(Cout,9*Cin), vectors->(Cout,1)."""
    cout, cin = w.shape[0], w.shape[1]
    w_k = jnp.transpose(w, (0, 2, 3, 1)).reshape(cout, 9 * cin)  # cols: (ky,kx,cin)
    return w_k, b.reshape(cout, 1), g.reshape(cout, 1), be.reshape(cout, 1)


def init_conv_block_params(key, ch_in, ch_out):
    """Deterministic synthetic parameters with PyTorch nn.Conv2d/BatchNorm2d shapes."""
    k1, k2 = jax.random.split(key)
    w1 = jax.random.normal(k1, (ch_out, ch_in, 3, 3), jnp.float32) * 0.1
    w2 = jax.random.normal(k2, (ch_out, ch_out, 3, 3), jnp.float32) * 0.1
    b1 = jnp.linspace(-0.05, 0.05, ch_out, dtype=jnp.float32)
    b2 = jnp.linspace(0.05, -0.05, ch_out, dtype=jnp.float32)
    g = jnp.ones((ch_out,), jnp.float32)    # BatchNorm2d default weight
    be = jnp.zeros((ch_out,), jnp.float32)  # BatchNorm2d default bias
    return {"w1": w1, "b1": b1, "g1": g, "be1": be,
            "w2": w2, "b2": b2, "g2": g, "be2": be}


@jax.jit
def conv_block_forward(x_nchw, params):
    """Equivalent of conv_block.forward(x), x in NCHW float32."""
    N, Cin, H, W = x_nchw.shape
    Cout = params["w1"].shape[0]
    NHW = N * H * W

    # Layout glue (outside the kernel): pixels on lanes, channels on sublanes.
    xf = jnp.transpose(x_nchw, (1, 0, 2, 3)).reshape(Cin, NHW)
    masks = _make_tap_masks(N, H, W)  # trace-time constant, tiny
    w1, b1, g1, be1 = _to_kernel_layout(params["w1"], params["b1"],
                                        params["g1"], params["be1"])
    w2, b2, g2, be2 = _to_kernel_layout(params["w2"], params["b2"],
                                        params["g2"], params["be2"])

    vmem = lambda: pl.BlockSpec(memory_space=pltpu.MemorySpace.VMEM)
    out_flat = pl.pallas_call(
        functools.partial(_fused_conv_block_kernel, width=W),
        out_shape=jax.ShapeDtypeStruct((Cout, NHW), jnp.float32),
        in_specs=[vmem() for _ in range(10)],
        out_specs=vmem(),
    )(xf, masks, w1, b1, g1, be1, w2, b2, g2, be2)

    return jnp.transpose(out_flat.reshape(Cout, N, H, W), (1, 0, 2, 3))


@jax.jit
def _reference_forward(x_nchw, params):
    """Pure-JAX/XLA reference of the same module (for a correctness check)."""
    def stage(x, w, b, g, be):
        y = jax.lax.conv_general_dilated(
            x, w, window_strides=(1, 1), padding=((1, 1), (1, 1)),
            dimension_numbers=("NCHW", "OIHW", "NCHW"))
        y = y + b[None, :, None, None]
        mean = jnp.mean(y, axis=(0, 2, 3), keepdims=True)
        var = jnp.mean((y - mean) ** 2, axis=(0, 2, 3), keepdims=True)
        y = (y - mean) * jax.lax.rsqrt(var + _BN_EPS)
        y = y * g[None, :, None, None] + be[None, :, None, None]
        return jnp.maximum(y, 0.0)
    y = stage(x_nchw, params["w1"], params["b1"], params["g1"], params["be1"])
    return stage(y, params["w2"], params["b2"], params["g2"], params["be2"])


if __name__ == "__main__":
    N, CH_IN, CH_OUT, H, W = 2, 4, 8, 16, 16

    key = jax.random.PRNGKey(0)
    kx_, kp = jax.random.split(key)
    x = jax.random.normal(kx_, (N, CH_IN, H, W), jnp.float32)
    params = init_conv_block_params(kp, CH_IN, CH_OUT)

    out = conv_block_forward(x, params)
    jax.block_until_ready(out)

    assert out.shape == (N, CH_OUT, H, W), out.shape
    assert bool(jnp.all(out >= 0.0)), "ReLU output must be non-negative"

    ref = _reference_forward(x, params)
    np.testing.assert_allclose(np.asarray(out), np.asarray(ref),
                               rtol=5e-2, atol=5e-2)
    print("KERNEL_OK")
</pallas_src>

<mosaic_0001>
module attributes {stable_mosaic.version = 11 : i64} {
  func.func @_fused_conv_block_kernel(%arg0: memref<4x512xf32, #tpu.memory_space<vmem>>, %arg1: memref<9x512xf32, #tpu.memory_space<vmem>>, %arg2: memref<8x36xf32, #tpu.memory_space<vmem>>, %arg3: memref<8x1xf32, #tpu.memory_space<vmem>>, %arg4: memref<8x1xf32, #tpu.memory_space<vmem>>, %arg5: memref<8x1xf32, #tpu.memory_space<vmem>>, %arg6: memref<8x72xf32, #tpu.memory_space<vmem>>, %arg7: memref<8x1xf32, #tpu.memory_space<vmem>>, %arg8: memref<8x1xf32, #tpu.memory_space<vmem>>, %arg9: memref<8x1xf32, #tpu.memory_space<vmem>>, %arg10: memref<8x512xf32, #tpu.memory_space<vmem>>) attributes {dimension_semantics = [], scalar_prefetch = 0 : i64, scratch_operands = 0 : i64, tpu.core_type = #tpu.core_type<tc>} {
    %c0 = arith.constant 0 : index
    %c0_0 = arith.constant 0 : index
    %0 = vector.load %arg1[%c0, %c0_0] : memref<9x512xf32, #tpu.memory_space<vmem>>, vector<9x512xf32>
    %c0_1 = arith.constant 0 : index
    %c0_2 = arith.constant 0 : index
    %1 = vector.load %arg0[%c0_1, %c0_2] : memref<4x512xf32, #tpu.memory_space<vmem>>, vector<4x512xf32>
    %2 = vector.extract_strided_slice %1 {offsets = [0, 495], sizes = [4, 17], strides = [1, 1]} : vector<4x512xf32> to vector<4x17xf32>
    %3 = vector.extract_strided_slice %1 {offsets = [0, 0], sizes = [4, 495], strides = [1, 1]} : vector<4x512xf32> to vector<4x495xf32>
    %4 = tpu.concatenate %2, %3 in 1 : vector<4x17xf32>, vector<4x495xf32> -> vector<4x512xf32>
    %5 = vector.extract_strided_slice %0 {offsets = [0, 0], sizes = [1, 512], strides = [1, 1]} : vector<9x512xf32> to vector<1x512xf32>
    %6 = vector.broadcast %5 : vector<1x512xf32> to vector<4x512xf32>
    %7 = arith.mulf %4, %6 : vector<4x512xf32>
    %8 = vector.extract_strided_slice %1 {offsets = [0, 496], sizes = [4, 16], strides = [1, 1]} : vector<4x512xf32> to vector<4x16xf32>
    %9 = vector.extract_strided_slice %1 {offsets = [0, 0], sizes = [4, 496], strides = [1, 1]} : vector<4x512xf32> to vector<4x496xf32>
    %10 = tpu.concatenate %8, %9 in 1 : vector<4x16xf32>, vector<4x496xf32> -> vector<4x512xf32>
    %11 = vector.extract_strided_slice %0 {offsets = [1, 0], sizes = [1, 512], strides = [1, 1]} : vector<9x512xf32> to vector<1x512xf32>
    %12 = vector.broadcast %11 : vector<1x512xf32> to vector<4x512xf32>
    %13 = arith.mulf %10, %12 : vector<4x512xf32>
    %14 = vector.extract_strided_slice %1 {offsets = [0, 497], sizes = [4, 15], strides = [1, 1]} : vector<4x512xf32> to vector<4x15xf32>
    %15 = vector.extract_strided_slice %1 {offsets = [0, 0], sizes = [4, 497], strides = [1, 1]} : vector<4x512xf32> to vector<4x497xf32>
    %16 = tpu.concatenate %14, %15 in 1 : vector<4x15xf32>, vector<4x497xf32> -> vector<4x512xf32>
    %17 = vector.extract_strided_slice %0 {offsets = [2, 0], sizes = [1, 512], strides = [1, 1]} : vector<9x512xf32> to vector<1x512xf32>
    %18 = vector.broadcast %17 : vector<1x512xf32> to vector<4x512xf32>
    %19 = arith.mulf %16, %18 : vector<4x512xf32>
    %20 = vector.extract_strided_slice %1 {offsets = [0, 511], sizes = [4, 1], strides = [1, 1]} : vector<4x512xf32> to vector<4x1xf32>
    %21 = vector.extract_strided_slice %1 {offsets = [0, 0], sizes = [4, 511], strides = [1, 1]} : vector<4x512xf32> to vector<4x511xf32>
    %22 = tpu.concatenate %20, %21 in 1 : vector<4x1xf32>, vector<4x511xf32> -> vector<4x512xf32>
    %23 = vector.extract_strided_slice %0 {offsets = [3, 0], sizes = [1, 512], strides = [1, 1]} : vector<9x512xf32> to vector<1x512xf32>
    %24 = vector.broadcast %23 : vector<1x512xf32> to vector<4x512xf32>
    %25 = arith.mulf %22, %24 : vector<4x512xf32>
    %26 = vector.extract_strided_slice %0 {offsets = [4, 0], sizes = [1, 512], strides = [1, 1]} : vector<9x512xf32> to vector<1x512xf32>
    %27 = vector.broadcast %26 : vector<1x512xf32> to vector<4x512xf32>
    %28 = arith.mulf %1, %27 : vector<4x512xf32>
    %29 = vector.extract_strided_slice %1 {offsets = [0, 1], sizes = [4, 511], strides = [1, 1]} : vector<4x512xf32> to vector<4x511xf32>
    %30 = vector.extract_strided_slice %1 {offsets = [0, 0], sizes = [4, 1], strides = [1, 1]} : vector<4x512xf32> to vector<4x1xf32>
    %31 = tpu.concatenate %29, %30 in 1 : vector<4x511xf32>, vector<4x1xf32> -> vector<4x512xf32>
    %32 = vector.extract_strided_slice %0 {offsets = [5, 0], sizes = [1, 512], strides = [1, 1]} : vector<9x512xf32> to vector<1x512xf32>
    %33 = vector.broadcast %32 : vector<1x512xf32> to vector<4x512xf32>
    %34 = arith.mulf %31, %33 : vector<4x512xf32>
    %35 = vector.extract_strided_slice %1 {offsets = [0, 15], sizes = [4, 497], strides = [1, 1]} : vector<4x512xf32> to vector<4x497xf32>
    %36 = vector.extract_strided_slice %1 {offsets = [0, 0], sizes = [4, 15], strides = [1, 1]} : vector<4x512xf32> to vector<4x15xf32>
    %37 = tpu.concatenate %35, %36 in 1 : vector<4x497xf32>, vector<4x15xf32> -> vector<4x512xf32>
    %38 = vector.extract_strided_slice %0 {offsets = [6, 0], sizes = [1, 512], strides = [1, 1]} : vector<9x512xf32> to vector<1x512xf32>
    %39 = vector.broadcast %38 : vector<1x512xf32> to vector<4x512xf32>
    %40 = arith.mulf %37, %39 : vector<4x512xf32>
    %41 = vector.extract_strided_slice %1 {offsets = [0, 16], sizes = [4, 496], strides = [1, 1]} : vector<4x512xf32> to vector<4x496xf32>
    %42 = vector.extract_strided_slice %1 {offsets = [0, 0], sizes = [4, 16], strides = [1, 1]} : vector<4x512xf32> to vector<4x16xf32>
    %43 = tpu.concatenate %41, %42 in 1 : vector<4x496xf32>, vector<4x16xf32> -> vector<4x512xf32>
    %44 = vector.extract_strided_slice %0 {offsets = [7, 0], sizes = [1, 512], strides = [1, 1]} : vector<9x512xf32> to vector<1x512xf32>
    %45 = vector.broadcast %44 : vector<1x512xf32> to vector<4x512xf32>
    %46 = arith.mulf %43, %45 : vector<4x512xf32>
    %47 = vector.extract_strided_slice %1 {offsets = [0, 17], sizes = [4, 495], strides = [1, 1]} : vector<4x512xf32> to vector<4x495xf32>
    %48 = vector.extract_strided_slice %1 {offsets = [0, 0], sizes = [4, 17], strides = [1, 1]} : vector<4x512xf32> to vector<4x17xf32>
    %49 = tpu.concatenate %47, %48 in 1 : vector<4x495xf32>, vector<4x17xf32> -> vector<4x512xf32>
    %50 = vector.extract_strided_slice %0 {offsets = [8, 0], sizes = [1, 512], strides = [1, 1]} : vector<9x512xf32> to vector<1x512xf32>
    %51 = vector.broadcast %50 : vector<1x512xf32> to vector<4x512xf32>
    %52 = arith.mulf %49, %51 : vector<4x512xf32>
    %53 = tpu.concatenate %7, %13, %19, %25, %28, %34, %40, %46, %52 in 0 : vector<4x512xf32>, vector<4x512xf32>, vector<4x512xf32>, vector<4x512xf32>, vector<4x512xf32>, vector<4x512xf32>, vector<4x512xf32>, vector<4x512xf32>, vector<4x512xf32> -> vector<36x512xf32>
    %c0_3 = arith.constant 0 : index
    %c0_4 = arith.constant 0 : index
    %54 = vector.load %arg2[%c0_3, %c0_4] : memref<8x36xf32, #tpu.memory_space<vmem>>, vector<8x36xf32>
    %cst = arith.constant dense<0.000000e+00> : vector<8x512xf32>
    %55 = tpu.matmul %54, %53, %cst {dimension_numbers = #tpu.dot_dimension_numbers<[1], [0], [0], [1], [0, 0, 1, 1], [], []>} : vector<8x36xf32>, vector<36x512xf32>, vector<8x512xf32> -> vector<8x512xf32>
    %c0_5 = arith.constant 0 : index
    %c0_6 = arith.constant 0 : index
    %56 = vector.load %arg3[%c0_5, %c0_6] : memref<8x1xf32, #tpu.memory_space<vmem>>, vector<8x1xf32>
    %57 = vector.broadcast %56 : vector<8x1xf32> to vector<8x512xf32>
    %58 = arith.addf %55, %57 : vector<8x512xf32>
    %cst_7 = arith.constant dense<0.000000e+00> : vector<8xf32>
    %59 = vector.multi_reduction <add>, %58, %cst_7 [1] : vector<8x512xf32> to vector<8xf32>
    %60 = vector.shape_cast %59 : vector<8xf32> to vector<8x1xf32>
    %cst_8 = arith.constant 5.120000e+02 : f32
    %61 = vector.broadcast %cst_8 : f32 to vector<8x1xf32>
    %62 = arith.divf %60, %61 : vector<8x1xf32>
    %63 = vector.broadcast %62 : vector<8x1xf32> to vector<8x512xf32>
    %64 = arith.subf %58, %63 : vector<8x512xf32>
    %65 = arith.mulf %64, %64 : vector<8x512xf32>
    %cst_9 = arith.constant dense<0.000000e+00> : vector<8xf32>
    %66 = vector.multi_reduction <add>, %65, %cst_9 [1] : vector<8x512xf32> to vector<8xf32>
    %67 = vector.shape_cast %66 : vector<8xf32> to vector<8x1xf32>
    %cst_10 = arith.constant 5.120000e+02 : f32
    %68 = vector.broadcast %cst_10 : f32 to vector<8x1xf32>
    %69 = arith.divf %67, %68 : vector<8x1xf32>
    %70 = vector.broadcast %62 : vector<8x1xf32> to vector<8x512xf32>
    %71 = arith.subf %58, %70 : vector<8x512xf32>
    %cst_11 = arith.constant 9.99999974E-6 : f32
    %72 = vector.broadcast %cst_11 : f32 to vector<8x1xf32>
    %73 = arith.addf %69, %72 : vector<8x1xf32>
    %74 = math.rsqrt %73 : vector<8x1xf32>
    %75 = vector.broadcast %74 : vector<8x1xf32> to vector<8x512xf32>
    %76 = arith.mulf %71, %75 : vector<8x512xf32>
    %c0_12 = arith.constant 0 : index
    %c0_13 = arith.constant 0 : index
    %77 = vector.load %arg4[%c0_12, %c0_13] : memref<8x1xf32, #tpu.memory_space<vmem>>, vector<8x1xf32>
    %78 = vector.broadcast %77 : vector<8x1xf32> to vector<8x512xf32>
    %79 = arith.mulf %76, %78 : vector<8x512xf32>
    %c0_14 = arith.constant 0 : index
    %c0_15 = arith.constant 0 : index
    %80 = vector.load %arg5[%c0_14, %c0_15] : memref<8x1xf32, #tpu.memory_space<vmem>>, vector<8x1xf32>
    %81 = vector.broadcast %80 : vector<8x1xf32> to vector<8x512xf32>
    %82 = arith.addf %79, %81 : vector<8x512xf32>
    %cst_16 = arith.constant 0.000000e+00 : f32
    %83 = vector.broadcast %cst_16 : f32 to vector<8x512xf32>
    %84 = arith.maximumf %82, %83 : vector<8x512xf32>
    %85 = vector.extract_strided_slice %84 {offsets = [0, 495], sizes = [8, 17], strides = [1, 1]} : vector<8x512xf32> to vector<8x17xf32>
    %86 = vector.extract_strided_slice %84 {offsets = [0, 0], sizes = [8, 495], strides = [1, 1]} : vector<8x512xf32> to vector<8x495xf32>
    %87 = tpu.concatenate %85, %86 in 1 : vector<8x17xf32>, vector<8x495xf32> -> vector<8x512xf32>
    %88 = vector.extract_strided_slice %0 {offsets = [0, 0], sizes = [1, 512], strides = [1, 1]} : vector<9x512xf32> to vector<1x512xf32>
    %89 = vector.broadcast %88 : vector<1x512xf32> to vector<8x512xf32>
    %90 = arith.mulf %87, %89 : vector<8x512xf32>
    %91 = vector.extract_strided_slice %84 {offsets = [0, 496], sizes = [8, 16], strides = [1, 1]} : vector<8x512xf32> to vector<8x16xf32>
    %92 = vector.extract_strided_slice %84 {offsets = [0, 0], sizes = [8, 496], strides = [1, 1]} : vector<8x512xf32> to vector<8x496xf32>
    %93 = tpu.concatenate %91, %92 in 1 : vector<8x16xf32>, vector<8x496xf32> -> vector<8x512xf32>
    %94 = vector.extract_strided_slice %0 {offsets = [1, 0], sizes = [1, 512], strides = [1, 1]} : vector<9x512xf32> to vector<1x512xf32>
    %95 = vector.broadcast %94 : vector<1x512xf32> to vector<8x512xf32>
    %96 = arith.mulf %93, %95 : vector<8x512xf32>
    %97 = vector.extract_strided_slice %84 {offsets = [0, 497], sizes = [8, 15], strides = [1, 1]} : vector<8x512xf32> to vector<8x15xf32>
    %98 = vector.extract_strided_slice %84 {offsets = [0, 0], sizes = [8, 497], strides = [1, 1]} : vector<8x512xf32> to vector<8x497xf32>
    %99 = tpu.concatenate %97, %98 in 1 : vector<8x15xf32>, vector<8x497xf32> -> vector<8x512xf32>
    %100 = vector.extract_strided_slice %0 {offsets = [2, 0], sizes = [1, 512], strides = [1, 1]} : vector<9x512xf32> to vector<1x512xf32>
    %101 = vector.broadcast %100 : vector<1x512xf32> to vector<8x512xf32>
    %102 = arith.mulf %99, %101 : vector<8x512xf32>
    %103 = vector.extract_strided_slice %84 {offsets = [0, 511], sizes = [8, 1], strides = [1, 1]} : vector<8x512xf32> to vector<8x1xf32>
    %104 = vector.extract_strided_slice %84 {offsets = [0, 0], sizes = [8, 511], strides = [1, 1]} : vector<8x512xf32> to vector<8x511xf32>
    %105 = tpu.concatenate %103, %104 in 1 : vector<8x1xf32>, vector<8x511xf32> -> vector<8x512xf32>
    %106 = vector.extract_strided_slice %0 {offsets = [3, 0], sizes = [1, 512], strides = [1, 1]} : vector<9x512xf32> to vector<1x512xf32>
    %107 = vector.broadcast %106 : vector<1x512xf32> to vector<8x512xf32>
    %108 = arith.mulf %105, %107 : vector<8x512xf32>
    %109 = vector.extract_strided_slice %0 {offsets = [4, 0], sizes = [1, 512], strides = [1, 1]} : vector<9x512xf32> to vector<1x512xf32>
    %110 = vector.broadcast %109 : vector<1x512xf32> to vector<8x512xf32>
    %111 = arith.mulf %84, %110 : vector<8x512xf32>
    %112 = vector.extract_strided_slice %84 {offsets = [0, 1], sizes = [8, 511], strides = [1, 1]} : vector<8x512xf32> to vector<8x511xf32>
    %113 = vector.extract_strided_slice %84 {offsets = [0, 0], sizes = [8, 1], strides = [1, 1]} : vector<8x512xf32> to vector<8x1xf32>
    %114 = tpu.concatenate %112, %113 in 1 : vector<8x511xf32>, vector<8x1xf32> -> vector<8x512xf32>
    %115 = vector.extract_strided_slice %0 {offsets = [5, 0], sizes = [1, 512], strides = [1, 1]} : vector<9x512xf32> to vector<1x512xf32>
    %116 = vector.broadcast %115 : vector<1x512xf32> to vector<8x512xf32>
    %117 = arith.mulf %114, %116 : vector<8x512xf32>
    %118 = vector.extract_strided_slice %84 {offsets = [0, 15], sizes = [8, 497], strides = [1, 1]} : vector<8x512xf32> to vector<8x497xf32>
    %119 = vector.extract_strided_slice %84 {offsets = [0, 0], sizes = [8, 15], strides = [1, 1]} : vector<8x512xf32> to vector<8x15xf32>
    %120 = tpu.concatenate %118, %119 in 1 : vector<8x497xf32>, vector<8x15xf32> -> vector<8x512xf32>
    %121 = vector.extract_strided_slice %0 {offsets = [6, 0], sizes = [1, 512], strides = [1, 1]} : vector<9x512xf32> to vector<1x512xf32>
    %122 = vector.broadcast %121 : vector<1x512xf32> to vector<8x512xf32>
    %123 = arith.mulf %120, %122 : vector<8x512xf32>
    %124 = vector.extract_strided_slice %84 {offsets = [0, 16], sizes = [8, 496], strides = [1, 1]} : vector<8x512xf32> to vector<8x496xf32>
    %125 = vector.extract_strided_slice %84 {offsets = [0, 0], sizes = [8, 16], strides = [1, 1]} : vector<8x512xf32> to vector<8x16xf32>
    %126 = tpu.concatenate %124, %125 in 1 : vector<8x496xf32>, vector<8x16xf32> -> vector<8x512xf32>
    %127 = vector.extract_strided_slice %0 {offsets = [7, 0], sizes = [1, 512], strides = [1, 1]} : vector<9x512xf32> to vector<1x512xf32>
    %128 = vector.broadcast %127 : vector<1x512xf32> to vector<8x512xf32>
    %129 = arith.mulf %126, %128 : vector<8x512xf32>
    %130 = vector.extract_strided_slice %84 {offsets = [0, 17], sizes = [8, 495], strides = [1, 1]} : vector<8x512xf32> to vector<8x495xf32>
    %131 = vector.extract_strided_slice %84 {offsets = [0, 0], sizes = [8, 17], strides = [1, 1]} : vector<8x512xf32> to vector<8x17xf32>
    %132 = tpu.concatenate %130, %131 in 1 : vector<8x495xf32>, vector<8x17xf32> -> vector<8x512xf32>
    %133 = vector.extract_strided_slice %0 {offsets = [8, 0], sizes = [1, 512], strides = [1, 1]} : vector<9x512xf32> to vector<1x512xf32>
    %134 = vector.broadcast %133 : vector<1x512xf32> to vector<8x512xf32>
    %135 = arith.mulf %132, %134 : vector<8x512xf32>
    %136 = tpu.concatenate %90, %96, %102, %108, %111, %117, %123, %129, %135 in 0 : vector<8x512xf32>, vector<8x512xf32>, vector<8x512xf32>, vector<8x512xf32>, vector<8x512xf32>, vector<8x512xf32>, vector<8x512xf32>, vector<8x512xf32>, vector<8x512xf32> -> vector<72x512xf32>
    %c0_17 = arith.constant 0 : index
    %c0_18 = arith.constant 0 : index
    %137 = vector.load %arg6[%c0_17, %c0_18] : memref<8x72xf32, #tpu.memory_space<vmem>>, vector<8x72xf32>
    %cst_19 = arith.constant dense<0.000000e+00> : vector<8x512xf32>
    %138 = tpu.matmul %137, %136, %cst_19 {dimension_numbers = #tpu.dot_dimension_numbers<[1], [0], [0], [1], [0, 0, 1, 1], [], []>} : vector<8x72xf32>, vector<72x512xf32>, vector<8x512xf32> -> vector<8x512xf32>
    %c0_20 = arith.constant 0 : index
    %c0_21 = arith.constant 0 : index
    %139 = vector.load %arg7[%c0_20, %c0_21] : memref<8x1xf32, #tpu.memory_space<vmem>>, vector<8x1xf32>
    %140 = vector.broadcast %139 : vector<8x1xf32> to vector<8x512xf32>
    %141 = arith.addf %138, %140 : vector<8x512xf32>
    %cst_22 = arith.constant dense<0.000000e+00> : vector<8xf32>
    %142 = vector.multi_reduction <add>, %141, %cst_22 [1] : vector<8x512xf32> to vector<8xf32>
    %143 = vector.shape_cast %142 : vector<8xf32> to vector<8x1xf32>
    %cst_23 = arith.constant 5.120000e+02 : f32
    %144 = vector.broadcast %cst_23 : f32 to vector<8x1xf32>
    %145 = arith.divf %143, %144 : vector<8x1xf32>
    %146 = vector.broadcast %145 : vector<8x1xf32> to vector<8x512xf32>
    %147 = arith.subf %141, %146 : vector<8x512xf32>
    %148 = arith.mulf %147, %147 : vector<8x512xf32>
    %cst_24 = arith.constant dense<0.000000e+00> : vector<8xf32>
    %149 = vector.multi_reduction <add>, %148, %cst_24 [1] : vector<8x512xf32> to vector<8xf32>
    %150 = vector.shape_cast %149 : vector<8xf32> to vector<8x1xf32>
    %cst_25 = arith.constant 5.120000e+02 : f32
    %151 = vector.broadcast %cst_25 : f32 to vector<8x1xf32>
    %152 = arith.divf %150, %151 : vector<8x1xf32>
    %153 = vector.broadcast %145 : vector<8x1xf32> to vector<8x512xf32>
    %154 = arith.subf %141, %153 : vector<8x512xf32>
    %cst_26 = arith.constant 9.99999974E-6 : f32
    %155 = vector.broadcast %cst_26 : f32 to vector<8x1xf32>
    %156 = arith.addf %152, %155 : vector<8x1xf32>
    %157 = math.rsqrt %156 : vector<8x1xf32>
    %158 = vector.broadcast %157 : vector<8x1xf32> to vector<8x512xf32>
    %159 = arith.mulf %154, %158 : vector<8x512xf32>
    %c0_27 = arith.constant 0 : index
    %c0_28 = arith.constant 0 : index
    %160 = vector.load %arg8[%c0_27, %c0_28] : memref<8x1xf32, #tpu.memory_space<vmem>>, vector<8x1xf32>
    %161 = vector.broadcast %160 : vector<8x1xf32> to vector<8x512xf32>
    %162 = arith.mulf %159, %161 : vector<8x512xf32>
    %c0_29 = arith.constant 0 : index
    %c0_30 = arith.constant 0 : index
    %163 = vector.load %arg9[%c0_29, %c0_30] : memref<8x1xf32, #tpu.memory_space<vmem>>, vector<8x1xf32>
    %164 = vector.broadcast %163 : vector<8x1xf32> to vector<8x512xf32>
    %165 = arith.addf %162, %164 : vector<8x512xf32>
    %cst_31 = arith.constant 0.000000e+00 : f32
    %166 = vector.broadcast %cst_31 : f32 to vector<8x512xf32>
    %167 = arith.maximumf %165, %166 : vector<8x512xf32>
    %c0_32 = arith.constant 0 : index
    %c0_33 = arith.constant 0 : index
    %168 = vector.load %arg10[%c0_32, %c0_33] : memref<8x512xf32, #tpu.memory_space<vmem>>, vector<8x512xf32>
    tpu.vector_store %arg10[%c0_32, %c0_33], %167 {strides = array<i32>} : memref<8x512xf32, #tpu.memory_space<vmem>>, vector<8x512xf32>,
    return
  }
}

</mosaic_0001>

<llo_original>
// kernel: conv_block_forward.1
$region0: #{conv_block_forward.1}
  #allocation0 [shape = 'u32[]', space=smem, size = 0x4, offset = 0x4, fixed_abs, tag = 'smem constant byte address 0x4 - core index']
  #allocation1 [shape = 'u32[72,128]{1,0:T(1,128)}', space=vmem, size = 0x9000, scoped, tag = 'internal scratch']
  %s0 = inlined_call_operand.vmem [shape: f32[4,512], index: 0, kind: input, shape index: {}]
  %s1 = inlined_call_operand.vmem [shape: f32[9,512], index: 1, kind: input, shape index: {}]
  %s2 = inlined_call_operand.vmem [shape: f32[8,36], index: 2, kind: input, shape index: {}]
  %s3 = inlined_call_operand.vmem [shape: f32[8,1], index: 3, kind: input, shape index: {}]
  %s4 = inlined_call_operand.vmem [shape: f32[8,1], index: 4, kind: input, shape index: {}]
  %s5 = inlined_call_operand.vmem [shape: f32[8,1], index: 5, kind: input, shape index: {}]
  %s6 = inlined_call_operand.vmem [shape: f32[8,72], index: 6, kind: input, shape index: {}]
  %s7 = inlined_call_operand.vmem [shape: f32[8,1], index: 7, kind: input, shape index: {}]
  %s8 = inlined_call_operand.vmem [shape: f32[8,1], index: 8, kind: input, shape index: {}]
  %s9 = inlined_call_operand.vmem [shape: f32[8,1], index: 9, kind: input, shape index: {}]
  %s10 = inlined_call_operand.vmem [shape: f32[8,512], index: 10, kind: output, shape index: {}]
  %s11 = sld [smem:[#allocation0]]
  $region50: #{conv_block_forward.1} parent=0
    _
  %s13 = ssub.s32 1, %s11
  %s14 = scalar_select 0, %s13, %s11
  // Predicated region
  $region2: #{conv_block_forward.1} parent=0 // pred_check
    _
  $region3: #{conv_block_forward.1} parent=0 // pred_check_branch
    %16 = sbr.rel (0) target = $region5
  $region4: #{conv_block_forward.1} parent=0 // pred_region
    _
  $region5: #{conv_block_forward.1} parent=0 // pred_fallthru
    _
  // Predicated region
  $region6: #{conv_block_forward.1} parent=0 // pred_check
    _
  $region7: #{conv_block_forward.1} parent=0 // pred_check_branch
    %18 = sbr.rel (0) target = $region9
  $region8: #{conv_block_forward.1} parent=0 // pred_region
    _
  $region9: #{conv_block_forward.1} parent=0 // pred_fallthru
    _
  // Predicated region
  $region10: #{conv_block_forward.1} parent=0 // pred_check
    _
  $region11: #{conv_block_forward.1} parent=0 // pred_check_branch
    %20 = sbr.rel (0) target = $region13
  $region12: #{conv_block_forward.1} parent=0 // pred_region
    _
  $region13: #{conv_block_forward.1} parent=0 // pred_fallthru
    _
  // Predicated region
  $region14: #{conv_block_forward.1} parent=0 // pred_check
    _
  $region15: #{conv_block_forward.1} parent=0 // pred_check_branch
    %22 = sbr.rel (0) target = $region17
  $region16: #{conv_block_forward.1} parent=0 // pred_region
    _
  $region17: #{conv_block_forward.1} parent=0 // pred_fallthru
    _
  // Predicated region
  $region18: #{conv_block_forward.1} parent=0 // pred_check
    _
  $region19: #{conv_block_forward.1} parent=0 // pred_check_branch
    %24 = sbr.rel (0) target = $region21
  $region20: #{conv_block_forward.1} parent=0 // pred_region
    _
  $region21: #{conv_block_forward.1} parent=0 // pred_fallthru
    _
  // Predicated region
  $region22: #{conv_block_forward.1} parent=0 // pred_check
    _
  $region23: #{conv_block_forward.1} parent=0 // pred_check_branch
    %26 = sbr.rel (0) target = $region25
  $region24: #{conv_block_forward.1} parent=0 // pred_region
    _
  $region25: #{conv_block_forward.1} parent=0 // pred_fallthru
    _
  // Predicated region
  $region26: #{conv_block_forward.1} parent=0 // pred_check
    _
  $region27: #{conv_block_forward.1} parent=0 // pred_check_branch
    %28 = sbr.rel (0) target = $region29
  $region28: #{conv_block_forward.1} parent=0 // pred_region
    _
  $region29: #{conv_block_forward.1} parent=0 // pred_fallthru
    _
  // Predicated region
  $region30: #{conv_block_forward.1} parent=0 // pred_check
    _
  $region31: #{conv_block_forward.1} parent=0 // pred_check_branch
    %30 = sbr.rel (0) target = $region33
  $region32: #{conv_block_forward.1} parent=0 // pred_region
    _
  $region33: #{conv_block_forward.1} parent=0 // pred_fallthru
    _
  // Predicated region
  $region34: #{conv_block_forward.1} parent=0 // pred_check
    _
  $region35: #{conv_block_forward.1} parent=0 // pred_check_branch
    %32 = sbr.rel (0) target = $region37
  $region36: #{conv_block_forward.1} parent=0 // pred_region
    _
  $region37: #{conv_block_forward.1} parent=0 // pred_fallthru
    _
  // Predicated region
  $region38: #{conv_block_forward.1} parent=0 // pred_check
    _
  $region39: #{conv_block_forward.1} parent=0 // pred_check_branch
    %34 = sbr.rel (0) target = $region41
  $region40: #{conv_block_forward.1} parent=0 // pred_region
    _
  $region41: #{conv_block_forward.1} parent=0 // pred_fallthru
    _
  %v35 = vld [vmem:[%s1] sm:$0xff]
  %v36 = vld [vmem:[%s1 + $0x8] sm:$0xff]
  %v37 = vld [vmem:[%s1 + $0x10] sm:$0xff]
  %v38 = vld [vmem:[%s1 + $0x18] sm:$0xff]
  %v39 = vld [vmem:[%s1 + $0x20] sm:$0x1]
  %v40 = vld [vmem:[%s1 + $0x28] sm:$0x1]
  %v41 = vld [vmem:[%s1 + $0x30] sm:$0x1]
  %v42 = vld [vmem:[%s1 + $0x38] sm:$0x1]
  %v43 = vld [vmem:[%s0] sm:$0xff]
  %v44 = vld [vmem:[%s0 + $0x8] sm:$0xff]
  %46 = vst [vmem:[#allocation1] ss:$2 sm:$0xff] %v44
  %v47 = vld.sshfl [vmem:[#allocation1 + $0x8] sm:$0xff pattern:$0x75316420]
  %48 = vrot.lane.b32.xlu0 %v47, 17
  %v49 = vpop.permute.xlu0 %48
  %52 = vst [vmem:[#allocation1] ss:$2 sm:$0xff] %v43
  %s53 = scalar_lea.vmem [#allocation1], 16
  %54 = vst [vmem:[%s53] ss:$2 sm:$0xff] %v44
  %v55 = vld.sshfl [vmem:[#allocation1] sm:$0xff pattern:$0x75316420]
  %v56 = vld.sshfl [vmem:[#allocation1 + $0x8] sm:$0xff pattern:$0x75316420]
  %v57 = vld.sshfl [vmem:[#allocation1 + $0x10] sm:$0xff pattern:$0x75316420]
  %v58 = vld.sshfl [vmem:[#allocation1 + $0x18] sm:$0xff pattern:$0x75316420]
  %59 = vrot.lane.b32.xlu0 %v55, 17
  %v60 = vpop.permute.xlu0 %59
  %61 = vrot.lane.b32.xlu0 %v56, 17
  %v62 = vpop.permute.xlu0 %61
  %63 = vrot.lane.b32.xlu0 %v57, 17
  %v64 = vpop.permute.xlu0 %63
  %65 = vrot.lane.b32.xlu0 %v58, 17
  %v66 = vpop.permute.xlu0 %65
  %vm67 = vcmask 138240
  %v68 = vsel %vm67, %v60, %v62
  %v69 = vsel %vm67, %v62, %v64
  %v70 = vsel %vm67, %v64, %v66
  %v75 = vsel %vm67, %v49, %v60
  %v76 = vperm.slane %v35, 0
  %v77 = vperm.slane %v36, 0
  %v78 = vperm.slane %v37, 0
  %v79 = vperm.slane %v38, 0
  %v80 = vmul.f32 %v75, %v76
  %v81 = vmul.f32 %v68, %v77
  %v82 = vmul.f32 %v69, %v78
  %v83 = vmul.f32 %v70, %v79
  %84 = vst [vmem:[#allocation1] ss:$2 sm:$0xff] %v44
  %v85 = vld.sshfl [vmem:[#allocation1 + $0x8] sm:$0xff pattern:$0x75316420]
  %86 = vrot.lane.b32.xlu0 %v85, 16
  %v87 = vpop.permute.xlu0 %86
  %89 = vst [vmem:[#allocation1] ss:$2 sm:$0xff] %v43
  %s90 = scalar_lea.vmem [#allocation1], 16
  %91 = vst [vmem:[%s90] ss:$2 sm:$0xff] %v44
  %v92 = vld.sshfl [vmem:[#allocation1] sm:$0xff pattern:$0x75316420]
  %v93 = vld.sshfl [vmem:[#allocation1 + $0x8] sm:$0xff pattern:$0x75316420]
  %v94 = vld.sshfl [vmem:[#allocation1 + $0x10] sm:$0xff pattern:$0x75316420]
  %v95 = vld.sshfl [vmem:[#allocation1 + $0x18] sm:$0xff pattern:$0x75316420]
  %96 = vrot.lane.b32.xlu0 %v92, 16
  %v97 = vpop.permute.xlu0 %96
  %98 = vrot.lane.b32.xlu0 %v93, 16
  %v99 = vpop.permute.xlu0 %98
  %100 = vrot.lane.b32.xlu0 %v94, 16
  %v101 = vpop.permute.xlu0 %100
  %102 = vrot.lane.b32.xlu0 %v95, 16
  %v103 = vpop.permute.xlu0 %102
  %vm104 = vcmask 130048
  %v105 = vsel %vm104, %v97, %v99
  %v106 = vsel %vm104, %v99, %v101
  %v107 = vsel %vm104, %v101, %v103
  %v112 = vsel %vm104, %v87, %v97
  %v113 = vperm.slane %v35, 1
  %v114 = vperm.slane %v36, 1
  %v115 = vperm.slane %v37, 1
  %v116 = vperm.slane %v38, 1
  %v117 = vmul.f32 %v112, %v113
  %v118 = vmul.f32 %v105, %v114
  %v119 = vmul.f32 %v106, %v115
  %v120 = vmul.f32 %v107, %v116
  %121 = vst [vmem:[#allocation1] ss:$2 sm:$0xff] %v44
  %v122 = vld.sshfl [vmem:[#allocation1 + $0x8] sm:$0xff pattern:$0x75316420]
  %123 = vrot.lane.b32.xlu0 %v122, 15
  %v124 = vpop.permute.xlu0 %123
  %126 = vst [vmem:[#allocation1] ss:$2 sm:$0xff] %v43
  %s127 = scalar_lea.vmem [#allocation1], 16
  %128 = vst [vmem:[%s127] ss:$2 sm:$0xff] %v44
  %v129 = vld.sshfl [vmem:[#allocation1] sm:$0xff pattern:$0x75316420]
  %v130 = vld.sshfl [vmem:[#allocation1 + $0x8] sm:$0xff pattern:$0x75316420]
  %v131 = vld.sshfl [vmem:[#allocation1 + $0x10] sm:$0xff pattern:$0x75316420]
  %v132 = vld.sshfl [vmem:[#allocation1 + $0x18] sm:$0xff pattern:$0x75316420]
  %133 = vrot.lane.b32.xlu0 %v129, 15
  %v134 = vpop.permute.xlu0 %133
  %135 = vrot.lane.b32.xlu0 %v130, 15
  %v136 = vpop.permute.xlu0 %135
  %137 = vrot.lane.b32.xlu0 %v131, 15
  %v138 = vpop.permute.xlu0 %137
  %139 = vrot.lane.b32.xlu0 %v132, 15
  %v140 = vpop.permute.xlu0 %139
  %vm141 = vcmask 121856
  %v142 = vsel %vm141, %v134, %v136
  %v143 = vsel %vm141, %v136, %v138
  %v144 = vsel %vm141, %v138, %v140
  %v149 = vsel %vm141, %v124, %v134
  %v150 = vperm.slane %v35, 2
  %v151 = vperm.slane %v36, 2
  %v152 = vperm.slane %v37, 2
  %v153 = vperm.slane %v38, 2
  %v154 = vmul.f32 %v149, %v150
  %v155 = vmul.f32 %v142, %v151
  %v156 = vmul.f32 %v143, %v152
  %v157 = vmul.f32 %v144, %v153
  %158 = vst [vmem:[#allocation1] ss:$2 sm:$0xff] %v44
  %v159 = vld.sshfl [vmem:[#allocation1 + $0x8] sm:$0xff pattern:$0x75316420]
  %160 = vrot.lane.b32.xlu0 %v159, 1
  %v161 = vpop.permute.xlu0 %160
  %163 = vst [vmem:[#allocation1] ss:$2 sm:$0xff] %v43
  %s164 = scalar_lea.vmem [#allocation1], 16
  %165 = vst [vmem:[%s164] ss:$2 sm:$0xff] %v44
  %v166 = vld.sshfl [vmem:[#allocation1] sm:$0xff pattern:$0x75316420]
  %v167 = vld.sshfl [vmem:[#allocation1 + $0x8] sm:$0xff pattern:$0x75316420]
  %v168 = vld.sshfl [vmem:[#allocation1 + $0x10] sm:$0xff pattern:$0x75316420]
  %v169 = vld.sshfl [vmem:[#allocation1 + $0x18] sm:$0xff pattern:$0x75316420]
  %170 = vrot.lane.b32.xlu0 %v166, 1
  %v171 = vpop.permute.xlu0 %170
  %172 = vrot.lane.b32.xlu0 %v167, 1
  %v173 = vpop.permute.xlu0 %172
  %174 = vrot.lane.b32.xlu0 %v168, 1
  %v175 = vpop.permute.xlu0 %174
  %176 = vrot.lane.b32.xlu0 %v169, 1
  %v177 = vpop.permute.xlu0 %176
  %vm178 = vcmask 7168
  %v179 = vsel %vm178, %v171, %v173
  %v180 = vsel %vm178, %v173, %v175
  %v181 = vsel %vm178, %v175, %v177
  %v186 = vsel %vm178, %v161, %v171
  %v187 = vperm.slane %v35, 3
  %v188 = vperm.slane %v36, 3
  %v189 = vperm.slane %v37, 3
  %v190 = vperm.slane %v38, 3
  %v191 = vmul.f32 %v186, %v187
  %v192 = vmul.f32 %v179, %v188
  %v193 = vmul.f32 %v180, %v189
  %v194 = vmul.f32 %v181, %v190
  %v195 = vperm.slane %v35, 4
  %v196 = vperm.slane %v36, 4
  %v197 = vperm.slane %v37, 4
  %v198 = vperm.slane %v38, 4
  %v203 = vrot.slane %v196, 4
  %v204 = vrot.slane %v198, 4
  %vm205 = vcmask 1043456
  %v206 = vsel %vm205, %v195, %v203
  %v207 = vsel %vm205, %v197, %v204
  %v210 = vmul.f32 %v43, %v206
  %v211 = vmul.f32 %v44, %v207
  %212 = vst [vmem:[#allocation1] ss:$2 sm:$0xff] %v43
  %s213 = scalar_lea.vmem [#allocation1], 16
  %214 = vst [vmem:[%s213] ss:$2 sm:$0xff] %v44
  %v215 = vld.sshfl [vmem:[#allocation1] sm:$0xff pattern:$0x75316420]
  %v216 = vld.sshfl [vmem:[#allocation1 + $0x8] sm:$0xff pattern:$0x75316420]
  %v217 = vld.sshfl [vmem:[#allocation1 + $0x10] sm:$0xff pattern:$0x75316420]
  %v218 = vld.sshfl [vmem:[#allocation1 + $0x18] sm:$0xff pattern:$0x75316420]
  %219 = vrot.lane.b32.xlu0 %v215, 127
  %v220 = vpop.permute.xlu0 %219
  %221 = vrot.lane.b32.xlu0 %v216, 127
  %v222 = vpop.permute.xlu0 %221
  %223 = vrot.lane.b32.xlu0 %v217, 127
  %v224 = vpop.permute.xlu0 %223
  %225 = vrot.lane.b32.xlu0 %v218, 127
  %v226 = vpop.permute.xlu0 %225
  %vm227 = vcmask 1039360
  %v228 = vsel %vm227, %v220, %v222
  %v229 = vsel %vm227, %v222, %v224
  %v230 = vsel %vm227, %v224, %v226
  %235 = vst [vmem:[#allocation1] ss:$2 sm:$0xff] %v43
  %v236 = vld.sshfl [vmem:[#allocation1] sm:$0xff pattern:$0x75316420]
  %237 = vrot.lane.b32.xlu0 %v236, 127
  %v238 = vpop.permute.xlu0 %237
  %v240 = vsel %vm227, %v226, %v238
  %v241 = vperm.slane %v35, 5
  %v242 = vperm.slane %v36, 5
  %v243 = vperm.slane %v37, 5
  %v244 = vperm.slane %v38, 5
  %v245 = vmul.f32 %v228, %v241
  %v246 = vmul.f32 %v229, %v242
  %v247 = vmul.f32 %v230, %v243
  %v248 = vmul.f32 %v240, %v244
  %249 = vst [vmem:[#allocation1] ss:$2 sm:$0xff] %v43
  %s250 = scalar_lea.vmem [#allocation1], 16
  %251 = vst [vmem:[%s250] ss:$2 sm:$0xff] %v44
  %v252 = vld.sshfl [vmem:[#allocation1] sm:$0xff pattern:$0x75316420]
  %v253 = vld.sshfl [vmem:[#allocation1 + $0x8] sm:$0xff pattern:$0x75316420]
  %v254 = vld.sshfl [vmem:[#allocation1 + $0x10] sm:$0xff pattern:$0x75316420]
  %v255 = vld.sshfl [vmem:[#allocation1 + $0x18] sm:$0xff pattern:$0x75316420]
  %256 = vrot.lane.b32.xlu0 %v252, 113
  %v257 = vpop.permute.xlu0 %256
  %258 = vrot.lane.b32.xlu0 %v253, 113
  %v259 = vpop.permute.xlu0 %258
  %260 = vrot.lane.b32.xlu0 %v254, 113
  %v261 = vpop.permute.xlu0 %260
  %262 = vrot.lane.b32.xlu0 %v255, 113
  %v263 = vpop.permute.xlu0 %262
  %vm264 = vcmask 924672
  %v265 = vsel %vm264, %v257, %v259
  %v266 = vsel %vm264, %v259, %v261
  %v267 = vsel %vm264, %v261, %v263
  %272 = vst [vmem:[#allocation1] ss:$2 sm:$0xff] %v43
  %v273 = vld.sshfl [vmem:[#allocation1] sm:$0xff pattern:$0x75316420]
  %274 = vrot.lane.b32.xlu0 %v273, 113
  %v275 = vpop.permute.xlu0 %274
  %v277 = vsel %vm264, %v263, %v275
  %v278 = vperm.slane %v35, 6
  %v279 = vperm.slane %v36, 6
  %v280 = vperm.slane %v37, 6
  %v281 = vperm.slane %v38, 6
  %v282 = vmul.f32 %v265, %v278
  %v283 = vmul.f32 %v266, %v279
  %v284 = vmul.f32 %v267, %v280
  %v285 = vmul.f32 %v277, %v281
  %286 = vst [vmem:[#allocation1] ss:$2 sm:$0xff] %v43
  %s287 = scalar_lea.vmem [#allocation1], 16
  %288 = vst [vmem:[%s287] ss:$2 sm:$0xff] %v44
  %v289 = vld.sshfl [vmem:[#allocation1] sm:$0xff pattern:$0x75316420]
  %v290 = vld.sshfl [vmem:[#allocation1 + $0x8] sm:$0xff pattern:$0x75316420]
  %v291 = vld.sshfl [vmem:[#allocation1 + $0x10] sm:$0xff pattern:$0x75316420]
  %v292 = vld.sshfl [vmem:[#allocation1 + $0x18] sm:$0xff pattern:$0x75316420]
  %293 = vrot.lane.b32.xlu0 %v289, 112
  %v294 = vpop.permute.xlu0 %293
  %295 = vrot.lane.b32.xlu0 %v290, 112
  %v296 = vpop.permute.xlu0 %295
  %297 = vrot.lane.b32.xlu0 %v291, 112
  %v298 = vpop.permute.xlu0 %297
  %299 = vrot.lane.b32.xlu0 %v292, 112
  %v300 = vpop.permute.xlu0 %299
  %vm301 = vcmask 916480
  %v302 = vsel %vm301, %v294, %v296
  %v303 = vsel %vm301, %v296, %v298
  %v304 = vsel %vm301, %v298, %v300
  %309 = vst [vmem:[#allocation1] ss:$2 sm:$0xff] %v43
  %v310 = vld.sshfl [vmem:[#allocation1] sm:$0xff pattern:$0x75316420]
  %311 = vrot.lane.b32.xlu0 %v310, 112
  %v312 = vpop.permute.xlu0 %311
  %v314 = vsel %vm301, %v300, %v312
  %v315 = vperm.slane %v35, 7
  %v316 = vperm.slane %v36, 7
  %v317 = vperm.slane %v37, 7
  %v318 = vperm.slane %v38, 7
  %v319 = vmul.f32 %v302, %v315
  %v320 = vmul.f32 %v303, %v316
  %v321 = vmul.f32 %v304, %v317
  %v322 = vmul.f32 %v314, %v318
  %323 = vst [vmem:[#allocation1] ss:$2 sm:$0xff] %v43
  %s324 = scalar_lea.vmem [#allocation1], 16
  %325 = vst [vmem:[%s324] ss:$2 sm:$0xff] %v44
  %v326 = vld.sshfl [vmem:[#allocation1] sm:$0xff pattern:$0x75316420]
  %v327 = vld.sshfl [vmem:[#allocation1 + $0x8] sm:$0xff pattern:$0x75316420]
  %v328 = vld.sshfl [vmem:[#allocation1 + $0x10] sm:$0xff pattern:$0x75316420]
  %v329 = vld.sshfl [vmem:[#allocation1 + $0x18] sm:$0xff pattern:$0x75316420]
  %330 = vrot.lane.b32.xlu0 %v326, 111
  %v331 = vpop.permute.xlu0 %330
  %332 = vrot.lane.b32.xlu0 %v327, 111
  %v333 = vpop.permute.xlu0 %332
  %334 = vrot.lane.b32.xlu0 %v328, 111
  %v335 = vpop.permute.xlu0 %334
  %336 = vrot.lane.b32.xlu0 %v329, 111
  %v337 = vpop.permute.xlu0 %336
  %vm338 = vcmask 908288
  %v339 = vsel %vm338, %v331, %v333
  %v340 = vsel %vm338, %v333, %v335
  %v341 = vsel %vm338, %v335, %v337
  %346 = vst [vmem:[#allocation1] ss:$2 sm:$0xff] %v43
  %v347 = vld.sshfl [vmem:[#allocation1] sm:$0xff pattern:$0x75316420]
  %348 = vrot.lane.b32.xlu0 %v347, 111
  %v349 = vpop.permute.xlu0 %348
  %v351 = vsel %vm338, %v337, %v349
  %v352 = vperm.slane %v39, 0
  %v353 = vperm.slane %v40, 0
  %v354 = vperm.slane %v41, 0
  %v355 = vperm.slane %v42, 0
  %v356 = vmul.f32 %v339, %v352
  %v357 = vmul.f32 %v340, %v353
  %v358 = vmul.f32 %v341, %v354
  %v359 = vmul.f32 %v351, %v355
  %v364 = vrot.slane %v117, 4
  %v365 = vrot.slane %v118, 4
  %v366 = vrot.slane %v119, 4
  %v367 = vrot.slane %v120, 4
  %v376 = vrot.slane %v191, 4
  %v377 = vrot.slane %v192, 4
  %v378 = vrot.slane %v193, 4
  %v379 = vrot.slane %v194, 4
  %386 = vst [vmem:[#allocation1] ss:$2 sm:$0xff] %v210
  %s387 = scalar_lea.vmem [#allocation1], 16
  %388 = vst [vmem:[%s387] ss:$2 sm:$0xff] %v211
  %v389 = vld.sshfl [vmem:[#allocation1] sm:$0xff pattern:$0x75316420]
  %v390 = vld.sshfl [vmem:[#allocation1 + $0x8] sm:$0xff pattern:$0x75316420]
  %v391 = vld.sshfl [vmem:[#allocation1 + $0x10] sm:$0xff pattern:$0x75316420]
  %v392 = vld.sshfl [vmem:[#allocation1 + $0x18] sm:$0xff pattern:$0x75316420]
  %v401 = vrot.slane %v245, 4
  %v402 = vrot.slane %v246, 4
  %v403 = vrot.slane %v247, 4
  %v404 = vrot.slane %v248, 4
  %v413 = vrot.slane %v319, 4
  %v414 = vrot.slane %v320, 4
  %v415 = vrot.slane %v321, 4
  %v416 = vrot.slane %v322, 4
  %v421 = vsel %vm205, %v80, %v364
  %v422 = vsel %vm205, %v81, %v365
  %v423 = vsel %vm205, %v82, %v366
  %v424 = vsel %vm205, %v83, %v367
  %v425 = vsel %vm205, %v154, %v376
  %v426 = vsel %vm205, %v155, %v377
  %v427 = vsel %vm205, %v156, %v378
  %v428 = vsel %vm205, %v157, %v379
  %v429 = vsel %vm205, %v389, %v401
  %v430 = vsel %vm205, %v390, %v402
  %v431 = vsel %vm205, %v391, %v403
  %v432 = vsel %vm205, %v392, %v404
  %v433 = vsel %vm205, %v282, %v413
  %v434 = vsel %vm205, %v283, %v414
  %v435 = vsel %vm205, %v284, %v415
  %v436 = vsel %vm205, %v285, %v416
  %v437 = vld [vmem:[%s2] sm:$0xff]
  %v438 = vld [vmem:[%s3] sm:$0xff]
  %440 = vset.pattern.permute.xlu0 0
  %441 = vperm.xlu0 %440, %v438
  %v442 = vpop.permute.xlu0 %441
  %vm444 = vcmask 293888
  %v446 = vsel %vm444, %v437, 0
  %v449 = vsel %vm205, %v356, 0
  %v452 = vsel %vm205, %v357, 0
  %v455 = vsel %vm205, %v358, 0
  %v458 = vsel %vm205, %v359, 0
  %460 = vmatpush.msra.mxu0 0.0
  %461 = vmatpush.msra.mxu0 0.0
  %462 = vmatpush.msra.mxu0 0.0
  %463 = vmatpush.msra.mxu0 0.0
  %464 = vmatpush.msra.mxu0 0.0
  %465 = vmatpush.msra.mxu0 0.0
  %466 = vmatpush.msra.mxu0 0.0
  %467 = vmatpush.msra.mxu0 0.0
  %468 = vmatpush.msra.mxu0 0.0
  %469 = vmatpush.msra.mxu0 0.0
  %470 = vmatpush.msra.mxu0 0.0
  %471 = vmatpush.msra.mxu0 %v449
  %472 = vmatpush.msra.mxu0 %v433
  %473 = vmatpush.msra.mxu0 %v429
  %474 = vmatpush.msra.mxu0 %v425
  %475 = vmatpush.msra.mxu0 %v421
  %476 = vmatmul.f32.gmra.mxu0 %v446
  %v477 = vpop.f32.mrf.mxu0
  %v478 = vadd.f32 %v442, %v477
  %479 = vdwg.mxu0
  %480 = vmatpush.msra.mxu0 0.0
  %481 = vmatpush.msra.mxu0 0.0
  %482 = vmatpush.msra.mxu0 0.0
  %483 = vmatpush.msra.mxu0 0.0
  %484 = vmatpush.msra.mxu0 0.0
  %485 = vmatpush.msra.mxu0 0.0
  %486 = vmatpush.msra.mxu0 0.0
  %487 = vmatpush.msra.mxu0 0.0
  %488 = vmatpush.msra.mxu0 0.0
  %489 = vmatpush.msra.mxu0 0.0
  %490 = vmatpush.msra.mxu0 0.0
  %491 = vmatpush.msra.mxu0 %v452
  %492 = vmatpush.msra.mxu0 %v434
  %493 = vmatpush.msra.mxu0 %v430
  %494 = vmatpush.msra.mxu0 %v426
  %495 = vmatpush.msra.mxu0 %v422
  %496 = vmatmul.f32.gmra.mxu0 %v446
  %v497 = vpop.f32.mrf.mxu0
  %v498 = vadd.f32 %v442, %v497
  %499 = vdwg.mxu0
  %500 = vmatpush.msra.mxu0 0.0
  %501 = vmatpush.msra.mxu0 0.0
  %502 = vmatpush.msra.mxu0 0.0
  %503 = vmatpush.msra.mxu0 0.0
  %504 = vmatpush.msra.mxu0 0.0
  %505 = vmatpush.msra.mxu0 0.0
  %506 = vmatpush.msra.mxu0 0.0
  %507 = vmatpush.msra.mxu0 0.0
  %508 = vmatpush.msra.mxu0 0.0
  %509 = vmatpush.msra.mxu0 0.0
  %510 = vmatpush.msra.mxu0 0.0
  %511 = vmatpush.msra.mxu0 %v455
  %512 = vmatpush.msra.mxu0 %v435
  %513 = vmatpush.msra.mxu0 %v431
  %514 = vmatpush.msra.mxu0 %v427
  %515 = vmatpush.msra.mxu0 %v423
  %516 = vmatmul.f32.gmra.mxu0 %v446
  %v517 = vpop.f32.mrf.mxu0
  %v518 = vadd.f32 %v442, %v517
  %519 = vdwg.mxu0
  %520 = vmatpush.msra.mxu0 0.0
  %521 = vmatpush.msra.mxu0 0.0
  %522 = vmatpush.msra.mxu0 0.0
  %523 = vmatpush.msra.mxu0 0.0
  %524 = vmatpush.msra.mxu0 0.0
  %525 = vmatpush.msra.mxu0 0.0
  %526 = vmatpush.msra.mxu0 0.0
  %527 = vmatpush.msra.mxu0 0.0
  %528 = vmatpush.msra.mxu0 0.0
  %529 = vmatpush.msra.mxu0 0.0
  %530 = vmatpush.msra.mxu0 0.0
  %531 = vmatpush.msra.mxu0 %v458
  %532 = vmatpush.msra.mxu0 %v436
  %533 = vmatpush.msra.mxu0 %v432
  %534 = vmatpush.msra.mxu0 %v428
  %535 = vmatpush.msra.mxu0 %v424
  %536 = vmatmul.f32.gmra.mxu0 %v446
  %v537 = vpop.f32.mrf.mxu0
  %v538 = vadd.f32 %v442, %v537
  %539 = vdwg.mxu0
  %v540 = vadd.f32 %v478, %v498
  %v541 = vadd.f32 %v540, %v518
  %v542 = vadd.f32 %v541, %v538
  %543 = vadd.xlane.f32.xlu0 %v542
  %v544 = vpop.xlane.xlu0 %543
  %v545 = vrcp.pop 512.0
  %v546 = vmul.f32 512.0, %v545
  %v547 = vsub.f32 1.0, %v546
  %v548 = vmul.f32 %v545, %v547
  %v549 = vadd.f32 %v545, %v548
  %vm550 = vweird.f32 %v545
  %v551 = vsel %vm550, %v545, %v549
  %v552 = vmul.f32 %v544, %v551
  %v553 = vsub.f32 %v478, %v552
  %v554 = vsub.f32 %v498, %v552
  %v555 = vsub.f32 %v518, %v552
  %v556 = vsub.f32 %v538, %v552
  %v557 = vmul.f32 %v553, %v553
  %v558 = vmul.f32 %v554, %v554
  %v559 = vmul.f32 %v555, %v555
  %v560 = vmul.f32 %v556, %v556
  %v561 = vadd.f32 %v557, %v558
  %v562 = vadd.f32 %v561, %v559
  %v563 = vadd.f32 %v562, %v560
  %564 = vadd.xlane.f32.xlu0 %v563
  %v565 = vpop.xlane.xlu0 %564
  %v566 = vmul.f32 %v565, %v551
  %v567 = vadd.f32 %v566, 1e-05
  %v568 = vrsqrt.pop %v567
  %v569 = vmul.f32 %v568, %v567
  %v570 = vmul.f32 %v569, %v568
  %v571 = vmul.f32 0.5, %v570
  %v572 = vsub.f32 1.5, %v571
  %v573 = vmul.f32 %v568, %v572
  %vm574 = vweird.f32 %v567
  %vm575 = vweird.f32 %v568
  %vm576 = vmor %vm574, %vm575
  %v577 = vsel %vm576, %v568, %v573
  %v578 = vmul.f32 %v553, %v577
  %v579 = vmul.f32 %v554, %v577
  %v580 = vmul.f32 %v555, %v577
  %v581 = vmul.f32 %v556, %v577
  %v582 = vld [vmem:[%s4] sm:$0xff]
  %584 = vset.pattern.permute.xlu0 0
  %585 = vperm.xlu0 %584, %v582
  %v586 = vpop.permute.xlu0 %585
  %v588 = vmul.f32 %v578, %v586
  %v589 = vmul.f32 %v579, %v586
  %v590 = vmul.f32 %v580, %v586
  %v591 = vmul.f32 %v581, %v586
  %v592 = vld [vmem:[%s5] sm:$0xff]
  %594 = vset.pattern.permute.xlu0 0
  %595 = vperm.xlu0 %594, %v592
  %v596 = vpop.permute.xlu0 %595
  %v598 = vadd.f32 %v588, %v596
  %v599 = vadd.f32 %v589, %v596
  %v600 = vadd.f32 %v590, %v596
  %v601 = vadd.f32 %v591, %v596
  %v602 = vmax.f32 %v598, 0.0
  %v603 = vmax.f32 %v599, 0.0
  %v604 = vmax.f32 %v600, 0.0
  %v605 = vmax.f32 %v601, 0.0
  %607 = vrot.lane.b32.xlu0 %v605, 17
  %v608 = vpop.permute.xlu0 %607
  %613 = vrot.lane.b32.xlu0 %v602, 17
  %v614 = vpop.permute.xlu0 %613
  %615 = vrot.lane.b32.xlu0 %v603, 17
  %v616 = vpop.permute.xlu0 %615
  %617 = vrot.lane.b32.xlu0 %v604, 17
  %v618 = vpop.permute.xlu0 %617
  %v619 = vsel %vm67, %v614, %v616
  %v620 = vsel %vm67, %v616, %v618
  %v621 = vsel %vm67, %v618, %v608
  %v626 = vsel %vm67, %v608, %v614
  %v627 = vmul.f32 %v626, %v76
  %v628 = vmul.f32 %v619, %v77
  %v629 = vmul.f32 %v620, %v78
  %v630 = vmul.f32 %v621, %v79
  %631 = vrot.lane.b32.xlu0 %v605, 16
  %v632 = vpop.permute.xlu0 %631
  %634 = vrot.lane.b32.xlu0 %v602, 16
  %v635 = vpop.permute.xlu0 %634
  %636 = vrot.lane.b32.xlu0 %v603, 16
  %v637 = vpop.permute.xlu0 %636
  %638 = vrot.lane.b32.xlu0 %v604, 16
  %v639 = vpop.permute.xlu0 %638
  %v640 = vsel %vm104, %v635, %v637
  %v641 = vsel %vm104, %v637, %v639
  %v642 = vsel %vm104, %v639, %v632
  %v647 = vsel %vm104, %v632, %v635
  %v648 = vmul.f32 %v647, %v113
  %v649 = vmul.f32 %v640, %v114
  %v650 = vmul.f32 %v641, %v115
  %v651 = vmul.f32 %v642, %v116
  %652 = vrot.lane.b32.xlu0 %v605, 15
  %v653 = vpop.permute.xlu0 %652
  %655 = vrot.lane.b32.xlu0 %v602, 15
  %v656 = vpop.permute.xlu0 %655
  %657 = vrot.lane.b32.xlu0 %v603, 15
  %v658 = vpop.permute.xlu0 %657
  %659 = vrot.lane.b32.xlu0 %v604, 15
  %v660 = vpop.permute.xlu0 %659
  %v661 = vsel %vm141, %v656, %v658
  %v662 = vsel %vm141, %v658, %v660
  %v663 = vsel %vm141, %v660, %v653
  %v668 = vsel %vm141, %v653, %v656
  %v669 = vmul.f32 %v668, %v150
  %v670 = vmul.f32 %v661, %v151
  %v671 = vmul.f32 %v662, %v152
  %v672 = vmul.f32 %v663, %v153
  %673 = vrot.lane.b32.xlu0 %v605, 1
  %v674 = vpop.permute.xlu0 %673
  %676 = vrot.lane.b32.xlu0 %v602, 1
  %v677 = vpop.permute.xlu0 %676
  %678 = vrot.lane.b32.xlu0 %v603, 1
  %v679 = vpop.permute.xlu0 %678
  %680 = vrot.lane.b32.xlu0 %v604, 1
  %v681 = vpop.permute.xlu0 %680
  %v682 = vsel %vm178, %v677, %v679
  %v683 = vsel %vm178, %v679, %v681
  %v684 = vsel %vm178, %v681, %v674
  %v689 = vsel %vm178, %v674, %v677
  %v690 = vmul.f32 %v689, %v187
  %v691 = vmul.f32 %v682, %v188
  %v692 = vmul.f32 %v683, %v189
  %v693 = vmul.f32 %v684, %v190
  %v694 = vmul.f32 %v602, %v195
  %v695 = vmul.f32 %v603, %v196
  %v696 = vmul.f32 %v604, %v197
  %v697 = vmul.f32 %v605, %v198
  %698 = vrot.lane.b32.xlu0 %v602, 127
  %v699 = vpop.permute.xlu0 %698
  %700 = vrot.lane.b32.xlu0 %v603, 127
  %v701 = vpop.permute.xlu0 %700
  %702 = vrot.lane.b32.xlu0 %v604, 127
  %v703 = vpop.permute.xlu0 %702
  %704 = vrot.lane.b32.xlu0 %v605, 127
  %v705 = vpop.permute.xlu0 %704
  %v706 = vsel %vm227, %v699, %v701
  %v707 = vsel %vm227, %v701, %v703
  %v708 = vsel %vm227, %v703, %v705
  %v714 = vsel %vm227, %v705, %v699
  %v715 = vmul.f32 %v706, %v241
  %v716 = vmul.f32 %v707, %v242
  %v717 = vmul.f32 %v708, %v243
  %v718 = vmul.f32 %v714, %v244
  %719 = vrot.lane.b32.xlu0 %v602, 113
  %v720 = vpop.permute.xlu0 %719
  %721 = vrot.lane.b32.xlu0 %v603, 113
  %v722 = vpop.permute.xlu0 %721
  %723 = vrot.lane.b32.xlu0 %v604, 113
  %v724 = vpop.permute.xlu0 %723
  %725 = vrot.lane.b32.xlu0 %v605, 113
  %v726 = vpop.permute.xlu0 %725
  %v727 = vsel %vm264, %v720, %v722
  %v728 = vsel %vm264, %v722, %v724
  %v729 = vsel %vm264, %v724, %v726
  %v735 = vsel %vm264, %v726, %v720
  %v736 = vmul.f32 %v727, %v278
  %v737 = vmul.f32 %v728, %v279
  %v738 = vmul.f32 %v729, %v280
  %v739 = vmul.f32 %v735, %v281
  %740 = vrot.lane.b32.xlu0 %v602, 112
  %v741 = vpop.permute.xlu0 %740
  %742 = vrot.lane.b32.xlu0 %v603, 112
  %v743 = vpop.permute.xlu0 %742
  %744 = vrot.lane.b32.xlu0 %v604, 112
  %v745 = vpop.permute.xlu0 %744
  %746 = vrot.lane.b32.xlu0 %v605, 112
  %v747 = vpop.permute.xlu0 %746
  %v748 = vsel %vm301, %v741, %v743
  %v749 = vsel %vm301, %v743, %v745
  %v750 = vsel %vm301, %v745, %v747
  %v756 = vsel %vm301, %v747, %v741
  %v757 = vmul.f32 %v748, %v315
  %v758 = vmul.f32 %v749, %v316
  %v759 = vmul.f32 %v750, %v317
  %v760 = vmul.f32 %v756, %v318
  %761 = vrot.lane.b32.xlu0 %v602, 111
  %v762 = vpop.permute.xlu0 %761
  %763 = vrot.lane.b32.xlu0 %v603, 111
  %v764 = vpop.permute.xlu0 %763
  %765 = vrot.lane.b32.xlu0 %v604, 111
  %v766 = vpop.permute.xlu0 %765
  %767 = vrot.lane.b32.xlu0 %v605, 111
  %v768 = vpop.permute.xlu0 %767
  %v769 = vsel %vm338, %v762, %v764
  %v770 = vsel %vm338, %v764, %v766
  %v771 = vsel %vm338, %v766, %v768
  %v777 = vsel %vm338, %v768, %v762
  %v778 = vmul.f32 %v769, %v352
  %v779 = vmul.f32 %v770, %v353
  %v780 = vmul.f32 %v771, %v354
  %v781 = vmul.f32 %v777, %v355
  %v782 = vld [vmem:[%s6] sm:$0xff]
  %v783 = vld [vmem:[%s7] sm:$0xff]
  %785 = vset.pattern.permute.xlu0 0
  %786 = vperm.xlu0 %785, %v783
  %v787 = vpop.permute.xlu0 %786
  %vm789 = vcmask 588800
  %v791 = vsel %vm789, %v782, 0
  %793 = vmatpush.msra.mxu0 0.0
  %794 = vmatpush.msra.mxu0 0.0
  %795 = vmatpush.msra.mxu0 0.0
  %796 = vmatpush.msra.mxu0 0.0
  %797 = vmatpush.msra.mxu0 0.0
  %798 = vmatpush.msra.mxu0 0.0
  %799 = vmatpush.msra.mxu0 0.0
  %800 = vmatpush.msra.mxu0 %v778
  %801 = vmatpush.msra.mxu0 %v757
  %802 = vmatpush.msra.mxu0 %v736
  %803 = vmatpush.msra.mxu0 %v715
  %804 = vmatpush.msra.mxu0 %v694
  %805 = vmatpush.msra.mxu0 %v690
  %806 = vmatpush.msra.mxu0 %v669
  %807 = vmatpush.msra.mxu0 %v648
  %808 = vmatpush.msra.mxu0 %v627
  %809 = vmatmul.f32.gmra.mxu0 %v791
  %v810 = vpop.f32.mrf.mxu0
  %v811 = vadd.f32 %v787, %v810
  %812 = vdwg.mxu0
  %813 = vmatpush.msra.mxu0 0.0
  %814 = vmatpush.msra.mxu0 0.0
  %815 = vmatpush.msra.mxu0 0.0
  %816 = vmatpush.msra.mxu0 0.0
  %817 = vmatpush.msra.mxu0 0.0
  %818 = vmatpush.msra.mxu0 0.0
  %819 = vmatpush.msra.mxu0 0.0
  %820 = vmatpush.msra.mxu0 %v779
  %821 = vmatpush.msra.mxu0 %v758
  %822 = vmatpush.msra.mxu0 %v737
  %823 = vmatpush.msra.mxu0 %v716
  %824 = vmatpush.msra.mxu0 %v695
  %825 = vmatpush.msra.mxu0 %v691
  %826 = vmatpush.msra.mxu0 %v670
  %827 = vmatpush.msra.mxu0 %v649
  %828 = vmatpush.msra.mxu0 %v628
  %829 = vmatmul.f32.gmra.mxu0 %v791
  %v830 = vpop.f32.mrf.mxu0
  %v831 = vadd.f32 %v787, %v830
  %832 = vdwg.mxu0
  %833 = vmatpush.msra.mxu0 0.0
  %834 = vmatpush.msra.mxu0 0.0
  %835 = vmatpush.msra.mxu0 0.0
  %836 = vmatpush.msra.mxu0 0.0
  %837 = vmatpush.msra.mxu0 0.0
  %838 = vmatpush.msra.mxu0 0.0
  %839 = vmatpush.msra.mxu0 0.0
  %840 = vmatpush.msra.mxu0 %v780
  %841 = vmatpush.msra.mxu0 %v759
  %842 = vmatpush.msra.mxu0 %v738
  %843 = vmatpush.msra.mxu0 %v717
  %844 = vmatpush.msra.mxu0 %v696
  %845 = vmatpush.msra.mxu0 %v692
  %846 = vmatpush.msra.mxu0 %v671
  %847 = vmatpush.msra.mxu0 %v650
  %848 = vmatpush.msra.mxu0 %v629
  %849 = vmatmul.f32.gmra.mxu0 %v791
  %v850 = vpop.f32.mrf.mxu0
  %v851 = vadd.f32 %v787, %v850
  %852 = vdwg.mxu0
  %853 = vmatpush.msra.mxu0 0.0
  %854 = vmatpush.msra.mxu0 0.0
  %855 = vmatpush.msra.mxu0 0.0
  %856 = vmatpush.msra.mxu0 0.0
  %857 = vmatpush.msra.mxu0 0.0
  %858 = vmatpush.msra.mxu0 0.0
  %859 = vmatpush.msra.mxu0 0.0
  %860 = vmatpush.msra.mxu0 %v781
  %861 = vmatpush.msra.mxu0 %v760
  %862 = vmatpush.msra.mxu0 %v739
  %863 = vmatpush.msra.mxu0 %v718
  %864 = vmatpush.msra.mxu0 %v697
  %865 = vmatpush.msra.mxu0 %v693
  %866 = vmatpush.msra.mxu0 %v672
  %867 = vmatpush.msra.mxu0 %v651
  %868 = vmatpush.msra.mxu0 %v630
  %869 = vmatmul.f32.gmra.mxu0 %v791
  %v870 = vpop.f32.mrf.mxu0
  %v871 = vadd.f32 %v787, %v870
  %872 = vdwg.mxu0
  %v873 = vadd.f32 %v811, %v831
  %v874 = vadd.f32 %v873, %v851
  %v875 = vadd.f32 %v874, %v871
  %876 = vadd.xlane.f32.xlu0 %v875
  %v877 = vpop.xlane.xlu0 %876
  %v878 = vmul.f32 %v877, %v551
  %v879 = vsub.f32 %v811, %v878
  %v880 = vsub.f32 %v831, %v878
  %v881 = vsub.f32 %v851, %v878
  %v882 = vsub.f32 %v871, %v878
  %v883 = vmul.f32 %v879, %v879
  %v884 = vmul.f32 %v880, %v880
  %v885 = vmul.f32 %v881, %v881
  %v886 = vmul.f32 %v882, %v882
  %v887 = vadd.f32 %v883, %v884
  %v888 = vadd.f32 %v887, %v885
  %v889 = vadd.f32 %v888, %v886
  %890 = vadd.xlane.f32.xlu0 %v889
  %v891 = vpop.xlane.xlu0 %890
  %v892 = vmul.f32 %v891, %v551
  %v893 = vadd.f32 %v892, 1e-05
  %v894 = vrsqrt.pop %v893
  %v895 = vmul.f32 %v894, %v893
  %v896 = vmul.f32 %v895, %v894
  %v897 = vmul.f32 0.5, %v896
  %v898 = vsub.f32 1.5, %v897
  %v899 = vmul.f32 %v894, %v898
  %vm900 = vweird.f32 %v893
  %vm901 = vweird.f32 %v894
  %vm902 = vmor %vm900, %vm901
  %v903 = vsel %vm902, %v894, %v899
  %v904 = vmul.f32 %v879, %v903
  %v905 = vmul.f32 %v880, %v903
  %v906 = vmul.f32 %v881, %v903
  %v907 = vmul.f32 %v882, %v903
  %v908 = vld [vmem:[%s8] sm:$0xff]
  %910 = vset.pattern.permute.xlu0 0
  %911 = vperm.xlu0 %910, %v908
  %v912 = vpop.permute.xlu0 %911
  %v914 = vmul.f32 %v904, %v912
  %v915 = vmul.f32 %v905, %v912
  %v916 = vmul.f32 %v906, %v912
  %v917 = vmul.f32 %v907, %v912
  %v918 = vld [vmem:[%s9] sm:$0xff]
  %920 = vset.pattern.permute.xlu0 0
  %921 = vperm.xlu0 %920, %v918
  %v922 = vpop.permute.xlu0 %921
  %v924 = vadd.f32 %v914, %v922
  %v925 = vadd.f32 %v915, %v922
  %v926 = vadd.f32 %v916, %v922
  %v927 = vadd.f32 %v917, %v922
  %v928 = vmax.f32 %v924, 0.0
  %v929 = vmax.f32 %v925, 0.0
  %v930 = vmax.f32 %v926, 0.0
  %v931 = vmax.f32 %v927, 0.0
  %932 = vst [vmem:[%s10] sm:$0xff] %v928
  %933 = vst [vmem:[%s10 + $0x8] sm:$0xff] %v929
  %934 = vst [vmem:[%s10 + $0x10] sm:$0xff] %v930
  %935 = vst [vmem:[%s10 + $0x18] sm:$0xff] %v931
  // Predicated region
  $region42: #{conv_block_forward.1} parent=0 // pred_check
    _
  $region43: #{conv_block_forward.1} parent=0 // pred_check_branch
    %937 = sbr.rel (0) target = $region45
  $region44: #{conv_block_forward.1} parent=0 // pred_region
    _
  $region45: #{conv_block_forward.1} parent=0 // pred_fallthru
    _
  // Predicated region
  $region46: #{conv_block_forward.1} parent=0 // pred_check
    _
  $region47: #{conv_block_forward.1} parent=0 // pred_check_branch
    %939 = sbr.rel (0) target = $region49
  $region48: #{conv_block_forward.1} parent=0 // pred_region
    _
  $region49: #{conv_block_forward.1} parent=0 // pred_fallthru
    _

</llo_original>
